<compile_context>
chip_gen: v6e
topology: v6e:2x2x1
jax: 0.10.0
libtpu: 0.0.40
codegen_flags: <defaults>
</compile_context>

<pallas_src>
import jax
import jax.numpy as jnp
from jax.experimental import pallas as pl
from jax.experimental.pallas import tpu as pltpu

_SINGLE_BLOCK_MAX_B = 1024   # up to here: whole problem in VMEM, no grid
_TM_MAX = 4096               # upper bound on the batch tile (multiple of 8)


def _round_up(n, m):
    return ((n + m - 1) // m) * m


def _linear_kernel(x_ref, wt_ref, b_ref, o_ref):
    # x: [B, H], wt: [H, O] (pre-transposed), b: [1, O], o: [B, O]
    acc = jnp.dot(x_ref[...], wt_ref[...], preferred_element_type=jnp.float32)
    o_ref[...] = (acc + b_ref[...]).astype(o_ref.dtype)


def _linear_single_block(x, wt, b2d, out_dtype):
    """Whole-problem-in-VMEM path for small batches (no grid, no pipeline)."""
    B, H = x.shape
    O = wt.shape[1]
    ce = pl.CostEstimate(
        flops=2 * B * H * O,
        transcendentals=0,
        bytes_accessed=4 * (B * H + H * O + O + B * O),
    )
    return pl.pallas_call(
        _linear_kernel,
        out_shape=jax.ShapeDtypeStruct((B, O), out_dtype),
        in_specs=[
            pl.BlockSpec(memory_space=pltpu.MemorySpace.VMEM),
            pl.BlockSpec(memory_space=pltpu.MemorySpace.VMEM),
            pl.BlockSpec(memory_space=pltpu.MemorySpace.VMEM),
        ],
        out_specs=pl.BlockSpec(memory_space=pltpu.MemorySpace.VMEM),
        cost_estimate=ce,
    )(x, wt, b2d)


def _linear_batch_tiled(x, wt, b2d, out_dtype, tm):
    """Batch-tiled path for large B (B must already be a multiple of tm).
    Weight/bias stay resident in VMEM; x / out are pipelined over the batch
    axis, which is marked "parallel" so v7x's two TensorCores split it."""
    B, H = x.shape
    O = wt.shape[1]
    return pl.pallas_call(
        _linear_kernel,
        out_shape=jax.ShapeDtypeStruct((B, O), out_dtype),
        grid_spec=pltpu.PrefetchScalarGridSpec(
            num_scalar_prefetch=0,
            grid=(B // tm,),
            in_specs=[
                pl.BlockSpec((tm, H), lambda i: (i, 0)),
                pl.BlockSpec((H, O), lambda i: (0, 0)),
                pl.BlockSpec((1, O), lambda i: (0, 0)),
            ],
            # True [tm, O] output block (O equals the full last dim, so the
            # (8,128) rule is satisfied); no lane padding, no post-slice.
            out_specs=pl.BlockSpec((tm, O), lambda i: (i, 0)),
        ),
        compiler_params=pltpu.CompilerParams(
            dimension_semantics=("parallel",),
        ),
    )(x, wt, b2d)


def prepare_linear_params(weight, bias):
    """One-time parameter prep (call at init, NOT per forward).

    PyTorch Linear stores weight as [out, in]; the MXU wants [in, out]."""
    wt = jnp.asarray(weight).T                 # [H, O]
    b2d = jnp.asarray(bias).reshape(1, -1)     # [1, O]
    return wt, b2d


def _pick_tm(B):
    """Batch tile: as close to _TM_MAX as possible while keeping >= 2 grid
    steps (v7x megacore) and a multiple of 8 sublanes."""
    tm = min(_TM_MAX, _round_up(pl.cdiv(B, 2), 8))
    return max(tm, 8)


def linear_pallas(x, wt, b2d):
    """y = x @ wt + b with wt already in [H, O] layout (see prepare_linear_params)."""
    B, H = x.shape
    H2, O = wt.shape
    assert H == H2, "weight/in-feature mismatch"

    if B <= _SINGLE_BLOCK_MAX_B:
        return _linear_single_block(x, wt, b2d, x.dtype)

    tm = _pick_tm(B)
    B_pad = _round_up(B, tm)
    if B_pad != B:
        # Pad a few batch rows instead of falling back to a huge un-pipelined
        # single block (which could exceed the scoped VMEM limit).
        x = jnp.pad(x, ((0, B_pad - B), (0, 0)))
    y = _linear_batch_tiled(x, wt, b2d, x.dtype, tm)
    return y[:B] if B_pad != B else y


def reshape_output_wrapper_forward(x, wt, b2d, shape):
    """ReshapeOutputWrapper.forward: inner Linear, then view to (batch, *shape)."""
    y = linear_pallas(x, wt, b2d)
    return y.reshape((x.shape[0],) + tuple(shape))


if __name__ == "__main__":
    key = jax.random.PRNGKey(0)
    k_x, k_w, k_b, k_x2 = jax.random.split(key, 4)

    batch, hidden = 2, 32
    shape = (4, 4, 4)                 # wrapper's target shape
    out_features = 4 * 4 * 4          # inner Linear output size

    x = jax.random.normal(k_x, (batch, hidden), dtype=jnp.float32)
    # Deterministic synthetic parameters (PyTorch Linear layout: [out, in]).
    weight = jax.random.normal(k_w, (out_features, hidden), dtype=jnp.float32) * 0.1
    bias = jax.random.normal(k_b, (out_features,), dtype=jnp.float32) * 0.1

    # One-time parameter prep (hoisted out of the forward).
    wt, b2d = prepare_linear_params(weight, bias)

    # Small-batch path (module-consistent shapes, single-block kernel).
    y = reshape_output_wrapper_forward(x, wt, b2d, shape)
    y = jax.block_until_ready(y)
    y_ref = (x @ weight.T + bias).reshape((batch,) + shape)
    assert y.shape == (batch,) + shape
    assert jnp.allclose(y, y_ref, atol=1e-5, rtol=1e-5)

    # Large-batch path: exercises the batch-tiled grid, the >=2-step tile
    # selection, and the non-multiple batch padding.
    big_b = 4103
    xb = jax.random.normal(k_x2, (big_b, hidden), dtype=jnp.float32)
    yb = jax.block_until_ready(reshape_output_wrapper_forward(xb, wt, b2d, shape))
    yb_ref = (xb @ weight.T + bias).reshape((big_b,) + shape)
    assert yb.shape == (big_b,) + shape
    assert jnp.allclose(yb, yb_ref, atol=1e-4, rtol=1e-4)

    print("KERNEL_OK")
</pallas_src>

<mosaic_0001>
module attributes {stable_mosaic.version = 11 : i64} {
  func.func @_linear_kernel(%arg0: memref<2x32xf32, #tpu.memory_space<vmem>>, %arg1: memref<32x64xf32, #tpu.memory_space<vmem>>, %arg2: memref<1x64xf32, #tpu.memory_space<vmem>>, %arg3: memref<2x64xf32, #tpu.memory_space<vmem>>) attributes {dimension_semantics = [], scalar_prefetch = 0 : i64, scratch_operands = 0 : i64, tpu.core_type = #tpu.core_type<tc>} {
    %c0 = arith.constant 0 : index
    %c0_0 = arith.constant 0 : index
    %0 = vector.load %arg0[%c0, %c0_0] : memref<2x32xf32, #tpu.memory_space<vmem>>, vector<2x32xf32>
    %c0_1 = arith.constant 0 : index
    %c0_2 = arith.constant 0 : index
    %1 = vector.load %arg1[%c0_1, %c0_2] : memref<32x64xf32, #tpu.memory_space<vmem>>, vector<32x64xf32>
    %cst = arith.constant dense<0.000000e+00> : vector<2x64xf32>
    %2 = tpu.matmul %0, %1, %cst {dimension_numbers = #tpu.dot_dimension_numbers<[1], [0], [0], [1], [0, 0, 1, 1], [], []>} : vector<2x32xf32>, vector<32x64xf32>, vector<2x64xf32> -> vector<2x64xf32>
    %c0_3 = arith.constant 0 : index
    %c0_4 = arith.constant 0 : index
    %3 = vector.load %arg2[%c0_3, %c0_4] : memref<1x64xf32, #tpu.memory_space<vmem>>, vector<1x64xf32>
    %4 = vector.broadcast %3 : vector<1x64xf32> to vector<2x64xf32>
    %5 = arith.addf %2, %4 : vector<2x64xf32>
    %c0_5 = arith.constant 0 : index
    %c0_6 = arith.constant 0 : index
    %6 = vector.load %arg3[%c0_5, %c0_6] : memref<2x64xf32, #tpu.memory_space<vmem>>, vector<2x64xf32>
    tpu.vector_store %arg3[%c0_5, %c0_6], %5 {strides = array<i32>} : memref<2x64xf32, #tpu.memory_space<vmem>>, vector<2x64xf32>,
    return
  }
}

</mosaic_0001>

<llo_original>
// kernel: tpu_custom_call.1
$region0: #{tpu_custom_call.1}
  #allocation0 [shape = 'u32[]', space=smem, size = 0x4, offset = 0x4, fixed_abs, tag = 'smem constant byte address 0x4 - core index']
  #allocation1 [shape = 'u32[144,128]{1,0:T(1,128)}', space=vmem, size = 0x12000, scoped, tag = 'internal scratch']
  %s0 = inlined_call_operand.hbm [shape: f32[2,32], index: 0, kind: input, shape index: {}]
  %s1 = inlined_call_operand.hbm [shape: f32[32,64], index: 1, kind: input, shape index: {}]
  %s2 = inlined_call_operand.vmem [shape: f32[1,64], index: 2, kind: input, shape index: {}]
  %s3 = inlined_call_operand.hbm [shape: f32[2,64], index: 3, kind: output, shape index: {}]
  %s4 = sld [smem:[#allocation0]]
  $region30: #{tpu_custom_call.1} parent=0
    _
  %s6 = ssub.s32 1, %s4
  %s7 = scalar_select 0, %s6, %s4
  $region1: #{tpu_custom_call.1} parent=0
    #allocation2 [shape = 'u8[1024]{0}', space=vmem, size = 0x400, scoped, tag = 'input window, operand 0, single buffered']
    #allocation3 [shape = 's32[1]{0}', space=sflag, size = 0x4, scoped, tag = 'scoped memory for tpu_custom_call.1']
    #allocation4 [shape = 's32[1]{0}', space=sflag, size = 0x4, scoped, tag = 'scoped memory for tpu_custom_call.1']
    #allocation5 [shape = 'u8[16384]{0}', space=vmem, size = 0x4000, scoped, tag = 'input window, operand 1, single buffered']
    #allocation6 [shape = 's32[1]{0}', space=sflag, size = 0x4, scoped, tag = 'scoped memory for tpu_custom_call.1']
    #allocation7 [shape = 'u8[1024]{0}', space=vmem, size = 0x400, scoped, tag = 'output window, operand 0, single buffered']
    %8 = vsyncpa [#allocation3], 0
    %9 = vsyncpa [#allocation6], 0
    %10 = vsyncpa [#allocation4], 0
    // Predicated region
    $region2: #{tpu_custom_call.1} parent=1 // pred_check
      _
    $region3: #{tpu_custom_call.1} parent=1 // pred_check_branch
      %12 = sbr.rel (0) target = $region5
    $region4: #{tpu_custom_call.1} parent=1 // pred_region
      %s14 = ssub.s32 32, 32
      %15 = vsyncadd [#allocation3], %s14
      %s17 = sshll.u32 [#allocation2], 4
      %s18 = int_to_ptr.vmem [resolvable:$true] %s17
      %20 = dma.hbm_to_vmem [thread:$0]  %s0, 32, %s18, [#allocation3]
    $region5: #{tpu_custom_call.1} parent=1 // pred_fallthru
      _
    // Predicated region
    $region6: #{tpu_custom_call.1} parent=1 // pred_check
      _
    $region7: #{tpu_custom_call.1} parent=1 // pred_check_branch
      %22 = sbr.rel (0) target = $region9
    $region8: #{tpu_custom_call.1} parent=1 // pred_region
      %s24 = ssub.s32 512, 512
      %25 = vsyncadd [#allocation6], %s24
      %s26 = sshll.u32 [#allocation5], 4
      %s27 = int_to_ptr.vmem [resolvable:$true] %s26
      %32 = dma.hbm_to_vmem [thread:$0]  %s1, 512, %s27, [#allocation6], 128, 128, 8
    $region9: #{tpu_custom_call.1} parent=1 // pred_fallthru
      _
    // Predicated region
    $region10: #{tpu_custom_call.1} parent=1 // pred_check
      _
    $region11: #{tpu_custom_call.1} parent=1 // pred_check_branch
      %34 = sbr.rel (0) target = $region13
    $region12: #{tpu_custom_call.1} parent=1 // pred_region
      _
    $region13: #{tpu_custom_call.1} parent=1 // pred_fallthru
      _
    // Predicated region
    $region14: #{tpu_custom_call.1} parent=1 // pred_check
      _
    $region15: #{tpu_custom_call.1} parent=1 // pred_check_branch
      %36 = sbr.rel (0) target = $region17
    $region16: #{tpu_custom_call.1} parent=1 // pred_region
      %37 = dma.done [#allocation3], 32
    $region17: #{tpu_custom_call.1} parent=1 // pred_fallthru
      _
    // Predicated region
    $region18: #{tpu_custom_call.1} parent=1 // pred_check
      _
    $region19: #{tpu_custom_call.1} parent=1 // pred_check_branch
      %39 = sbr.rel (0) target = $region21
    $region20: #{tpu_custom_call.1} parent=1 // pred_region
      %40 = dma.done [#allocation6], 512
    $region21: #{tpu_custom_call.1} parent=1 // pred_fallthru
      _
    %v41 = vld [vmem:[#allocation2] sm:$0x3]
    %v42 = vld [vmem:[#allocation5] sm:$0xff]
    %v43 = vld [vmem:[#allocation5 + $0x8] sm:$0xff]
    %v44 = vld [vmem:[#allocation5 + $0x10] sm:$0xff]
    %v45 = vld [vmem:[#allocation5 + $0x18] sm:$0xff]
    %v46 = vld [vmem:[%s2] sm:$0x1]
    %v48 = vlaneseq
    %v49 = vshrl.u32 %v48, 7
    %v50 = vsub.s32 0, %v49
    %v51 = vrot.slane %v46, %v50
    %vm53 = vcmask 261120
    %v55 = vsel %vm53, %v41, 0
    %57 = vmatprep.subr.mxu0 0.0
    %58 = vmatpush1.msra.mxu0 0.0
    %59 = vmatprep.subr.mxu0 0.0
    %60 = vmatpush1.msra.mxu0 0.0
    %61 = vmatprep.subr.mxu0 0.0
    %62 = vmatpush1.msra.mxu0 0.0
    %63 = vmatprep.subr.mxu0 0.0
    %64 = vmatpush1.msra.mxu0 0.0
    %65 = vmatprep.subr.mxu0 0.0
    %66 = vmatpush1.msra.mxu0 0.0
    %67 = vmatprep.subr.mxu0 0.0
    %68 = vmatpush1.msra.mxu0 0.0
    %69 = vmatprep.subr.mxu0 0.0
    %70 = vmatpush1.msra.mxu0 0.0
    %71 = vmatprep.subr.mxu0 0.0
    %72 = vmatpush1.msra.mxu0 0.0
    %73 = vmatprep.subr.mxu0 0.0
    %74 = vmatpush1.msra.mxu0 0.0
    %75 = vmatprep.subr.mxu0 0.0
    %76 = vmatpush1.msra.mxu0 0.0
    %77 = vmatprep.subr.mxu0 0.0
    %78 = vmatpush1.msra.mxu0 0.0
    %79 = vmatprep.subr.mxu0 0.0
    %80 = vmatpush1.msra.mxu0 0.0
    %81 = vmatprep.subr.mxu0 0.0
    %82 = vmatpush1.msra.mxu0 %v45
    %83 = vmatprep.subr.mxu0 0.0
    %84 = vmatpush1.msra.mxu0 %v44
    %85 = vmatprep.subr.mxu0 0.0
    %86 = vmatpush1.msra.mxu0 %v43
    %87 = vmatprep.subr.mxu0 0.0
    %88 = vmatpush1.msra.mxu0 %v42
    %89 = vmatprep.subr.mxu0 0.0
    %90 = vmatpush2.msra.mxu0 0.0
    %91 = vmatprep.subr.mxu0 0.0
    %92 = vmatpush2.msra.mxu0 0.0
    %93 = vmatprep.subr.mxu0 0.0
    %94 = vmatpush2.msra.mxu0 0.0
    %95 = vmatprep.subr.mxu0 0.0
    %96 = vmatpush2.msra.mxu0 0.0
    %97 = vmatprep.subr.mxu0 0.0
    %98 = vmatpush2.msra.mxu0 0.0
    %99 = vmatprep.subr.mxu0 0.0
    %100 = vmatpush2.msra.mxu0 0.0
    %101 = vmatprep.subr.mxu0 0.0
    %102 = vmatpush2.msra.mxu0 0.0
    %103 = vmatprep.subr.mxu0 0.0
    %104 = vmatpush2.msra.mxu0 0.0
    %105 = vmatprep.subr.mxu0 0.0
    %106 = vmatpush2.msra.mxu0 0.0
    %107 = vmatprep.subr.mxu0 0.0
    %108 = vmatpush2.msra.mxu0 0.0
    %109 = vmatprep.subr.mxu0 0.0
    %110 = vmatpush2.msra.mxu0 0.0
    %111 = vmatprep.subr.mxu0 0.0
    %112 = vmatpush2.msra.mxu0 0.0
    %113 = vmatprep.subr.mxu0 0.0
    %114 = vmatpush2.msra.mxu0 0.0
    %115 = vmatprep.subr.mxu0 0.0
    %116 = vmatpush2.msra.mxu0 0.0
    %117 = vmatprep.subr.mxu0 0.0
    %118 = vmatpush2.msra.mxu0 0.0
    %119 = vmatprep.subr.mxu0 0.0
    %120 = vmatpush2.msra.mxu0 0.0
    %121 = vmatprep.mubr.f32.mxu0 0.0
    %122 = vmatmul.mubr.f32.gmra.mxu0 %v55
    %v123 = vpop.f32.mrf.mxu0
    %v124 = vadd.f32 %v51, %v123
    %v125 = vpop.f32.mrf.mxu0
    %126 = vdwg.mxu0
    %vm127 = vcmask 517120
    %128 = vst.msk [vmem:[#allocation7] sm:$0x3] %vm127, %v124
    // Predicated region
    $region22: #{tpu_custom_call.1} parent=1 // pred_check
      _
    $region23: #{tpu_custom_call.1} parent=1 // pred_check_branch
      %130 = sbr.rel (0) target = $region25
    $region24: #{tpu_custom_call.1} parent=1 // pred_region
      %s132 = ssub.s32 32, 32
      %133 = vsyncadd [#allocation4], %s132
      %s135 = sshll.u32 [#allocation7], 4
      %s136 = int_to_ptr.vmem [resolvable:$true] %s135
      %138 = dma.vmem_to_hbm [thread:$0]  %s136, 32, %s3, [#allocation4]
    $region25: #{tpu_custom_call.1} parent=1 // pred_fallthru
      _
    // Predicated region
    $region26: #{tpu_custom_call.1} parent=1 // pred_check
      _
    $region27: #{tpu_custom_call.1} parent=1 // pred_check_branch
      %140 = sbr.rel (0) target = $region29
    $region28: #{tpu_custom_call.1} parent=1 // pred_region
      %141 = dma.done [#allocation4], 32
    $region29: #{tpu_custom_call.1} parent=1 // pred_fallthru
      _
    %142 = vsyncpa [#allocation3], 1
    %143 = vsyncpa [#allocation6], 1
    %144 = vsyncpa [#allocation4], 1

</llo_original>
